<compile_context>
chip_gen: v7x
topology: tpu7x:2x2x1
jax: 0.10.0
libtpu: 0.0.40
codegen_flags: <defaults>
</compile_context>

<pallas_src>
import jax
import jax.numpy as jnp
from jax.experimental import pallas as pl
from jax.experimental.pallas import tpu as pltpu

_LANES = 128
_SUBLANES = 8
_MAX_TILE_ROWS = 8192   # 8192 * 128 * 4 B = 4 MiB per output block.
_STRIP_ROWS = 512       # 512 * 128 * 4 B = 256 KiB per in-kernel PRNG strip.


def _randn_affine_kernel(seed_ref, mean_ref, std_ref, out_ref):
    """out = mean + N(0,1) * std with the HW sampler, strip-mined lane-dense."""
    # Two seed words -> no (seed, tile) stream collisions across calls/tiles.
    pltpu.prng_seed(seed_ref[0], pl.program_id(0))
    mean = mean_ref[...]           # (1, 128) lane vector, broadcasts over rows
    std = std_ref[...]
    tile_rows = out_ref.shape[0]   # static
    start = 0
    while start < tile_rows:       # static python loop (fully unrolled)
        size = min(_STRIP_ROWS, tile_rows - start)
        z = pltpu.stateful_normal((size, _LANES), jnp.float32)
        out_ref[start:start + size, :] = mean + z * std
        start += size


def _affine_kernel(z_ref, mean_ref, std_ref, out_ref):
    """Portable fallback: normals are supplied from the wrapper."""
    out_ref[...] = mean_ref[...] + z_ref[...] * std_ref[...]


def _tile_plan(total):
    """Rows (sublane-padded), tile_rows, grid for a lane-dense (rows,128) slab."""
    rows = -(-total // _LANES)                        # ceil to lane rows
    rows = -(-rows // _SUBLANES) * _SUBLANES          # pad rows to 8 sublanes
    if rows >= 2 * _SUBLANES:
        # >= 2 tiles so both v7x TensorCores get work; cap block at 4 MiB.
        half = -(-rows // 2)
        half = -(-half // _SUBLANES) * _SUBLANES
        tile_rows = min(_MAX_TILE_ROWS, half)
    else:
        tile_rows = rows
    grid = (-(-rows // tile_rows),)                   # partial last tile is OK
    return rows, tile_rows, grid


def _lane_vector(vals, a_size):
    """Map per-action params onto the 128-lane axis of the slab, if possible."""
    if vals.shape[0] == 1:
        return jnp.full((1, _LANES), vals[0], dtype=jnp.float32)
    if vals.shape[0] == a_size and _LANES % a_size == 0:
        # slab element (r, l) maps to action dim (r*128 + l) % a_size == l % a_size
        return jnp.tile(vals, _LANES // a_size).reshape(1, _LANES)
    return None


def _hw_prng_slab(seed, mean_lane, std_lane, rows, tile_rows, grid):
    seed_arr = jnp.asarray([seed], dtype=jnp.int32)
    return pl.pallas_call(
        _randn_affine_kernel,
        out_shape=jax.ShapeDtypeStruct((rows, _LANES), jnp.float32),
        grid=grid,
        in_specs=[
            pl.BlockSpec(memory_space=pltpu.MemorySpace.SMEM),   # seed (1,)
            pl.BlockSpec((1, _LANES), lambda i: (0, 0)),         # mean lanes
            pl.BlockSpec((1, _LANES), lambda i: (0, 0)),         # std lanes
        ],
        out_specs=pl.BlockSpec((tile_rows, _LANES), lambda i: (i, 0)),
        compiler_params=pltpu.CompilerParams(
            dimension_semantics=("parallel",)),
    )(seed_arr, mean_lane, std_lane)


def _portable_slab(seed, mean_lane, std_lane, rows, tile_rows, grid):
    z = jax.random.normal(jax.random.PRNGKey(seed), (rows, _LANES), jnp.float32)
    return pl.pallas_call(
        _affine_kernel,
        out_shape=jax.ShapeDtypeStruct((rows, _LANES), jnp.float32),
        grid=grid,
        in_specs=[
            pl.BlockSpec((tile_rows, _LANES), lambda i: (i, 0)),  # z
            pl.BlockSpec((1, _LANES), lambda i: (0, 0)),          # mean lanes
            pl.BlockSpec((1, _LANES), lambda i: (0, 0)),          # std lanes
        ],
        out_specs=pl.BlockSpec((tile_rows, _LANES), lambda i: (i, 0)),
        compiler_params=pltpu.CompilerParams(
            dimension_semantics=("parallel",)),
    )(z, mean_lane, std_lane)


def randn_agent_forward(obs, means, stds, a_size, seed=0):
    """JAX/Pallas equivalent of RandnAgent.forward(obs).

    obs:   any array whose leading dim is the batch size (otherwise unused)
    means: scalar, (1,) or (a_size,) float values
    stds:  scalar, (1,) or (a_size,) float values
    """
    batch = obs.shape[0]
    total = batch * a_size

    means_arr = jnp.asarray(means, dtype=jnp.float32).reshape(-1)
    stds_arr = jnp.asarray(stds, dtype=jnp.float32).reshape(-1)

    mean_lane = _lane_vector(means_arr, a_size)
    std_lane = _lane_vector(stds_arr, a_size)
    fused = (mean_lane is not None) and (std_lane is not None)
    if not fused:
        # Awkward a_size: kernel emits N(0,1); affine applied in the wrapper.
        mean_lane = jnp.zeros((1, _LANES), dtype=jnp.float32)
        std_lane = jnp.ones((1, _LANES), dtype=jnp.float32)

    rows, tile_rows, grid = _tile_plan(total)

    slab = None
    if jax.default_backend() == "tpu":
        try:
            slab = _hw_prng_slab(seed, mean_lane, std_lane, rows, tile_rows, grid)
        except Exception:
            slab = None   # e.g. forced interpret mode: Mosaic-only PRNG ops
    if slab is None:
        slab = _portable_slab(seed, mean_lane, std_lane, rows, tile_rows, grid)

    flat = slab.reshape(-1)
    if rows * _LANES != total:
        flat = flat[:total]
    actions = flat.reshape(batch, a_size)
    if not fused:
        actions = means_arr.reshape(1, -1) + actions * stds_arr.reshape(1, -1)
    return actions


if __name__ == "__main__":
    key = jax.random.PRNGKey(0)

    # Small shapes consistent with the module: stacked image observations
    # (batch, obs_depth * channels, H, W) and an 8-dim continuous action.
    batch, obs_depth, channels, spatial = 2, 2, 2, 16
    a_size = 8
    obs = jax.random.normal(
        key, (batch, obs_depth * channels, spatial, spatial), dtype=jnp.float32)

    # RandnAgent stores scalar means/stds as length-1 FloatTensors.
    actions = randn_agent_forward(obs, 0.5, 2.0, a_size, seed=0)
    actions = jax.block_until_ready(actions)
    assert actions.shape == (batch, a_size)
    assert actions.dtype == jnp.float32
    assert bool(jnp.all(jnp.isfinite(actions)))
    assert float(jnp.std(actions)) > 1e-3     # not degenerate

    # Per-action vector means/stds (fused in-kernel lane vector) at a slightly
    # larger batch: exercises multi-tile grid, per-tile seed streams, and a
    # coarse distribution sanity check.
    batch2 = 256
    obs2 = jnp.zeros((batch2, 4), dtype=jnp.float32)
    v_means = jnp.arange(a_size, dtype=jnp.float32) * 0.1
    v_stds = jnp.full((a_size,), 1.5, dtype=jnp.float32)
    acts2 = jax.block_until_ready(
        randn_agent_forward(obs2, v_means, v_stds, a_size, seed=7))
    assert acts2.shape == (batch2, a_size)
    assert acts2.dtype == jnp.float32
    assert bool(jnp.all(jnp.isfinite(acts2)))
    assert bool(jnp.all(jnp.abs(jnp.mean(acts2, axis=0) - v_means) < 0.6))
    assert abs(float(jnp.std(acts2 - v_means.reshape(1, -1))) - 1.5) < 0.6

    print("KERNEL_OK")
</pallas_src>

<mosaic_0001>
module attributes {stable_mosaic.version = 11 : i64} {
  func.func @_affine_kernel(%arg0: i32, %arg1: memref<8x128xf32, #tpu.memory_space<vmem>>, %arg2: memref<1x128xf32, #tpu.memory_space<vmem>>, %arg3: memref<1x128xf32, #tpu.memory_space<vmem>>, %arg4: memref<8x128xf32, #tpu.memory_space<vmem>>) attributes {dimension_semantics = [#tpu.dimension_semantics<parallel>], iteration_bounds = array<i64: 1>, scalar_prefetch = 0 : i64, scratch_operands = 0 : i64, tpu.core_type = #tpu.core_type<tc>, window_params = [{transform_indices = @transform_0, window_bounds = array<i64: 8, 128>}, {pipeline_mode = #tpu.pipeline_mode<synchronous>, transform_indices = @transform_1, window_bounds = array<i64: 1, 128>}, {pipeline_mode = #tpu.pipeline_mode<synchronous>, transform_indices = @transform_2, window_bounds = array<i64: 1, 128>}, {transform_indices = @transform_3, window_bounds = array<i64: 8, 128>}]} {
    %c0 = arith.constant 0 : index
    %c0_0 = arith.constant 0 : index
    %0 = vector.load %arg2[%c0, %c0_0] : memref<1x128xf32, #tpu.memory_space<vmem>>, vector<1x128xf32>
    %c0_1 = arith.constant 0 : index
    %c0_2 = arith.constant 0 : index
    %1 = vector.load %arg1[%c0_1, %c0_2] : memref<8x128xf32, #tpu.memory_space<vmem>>, vector<8x128xf32>
    %c0_3 = arith.constant 0 : index
    %c0_4 = arith.constant 0 : index
    %2 = vector.load %arg3[%c0_3, %c0_4] : memref<1x128xf32, #tpu.memory_space<vmem>>, vector<1x128xf32>
    %3 = vector.broadcast %2 : vector<1x128xf32> to vector<8x128xf32>
    %4 = arith.mulf %1, %3 : vector<8x128xf32>
    %5 = vector.broadcast %0 : vector<1x128xf32> to vector<8x128xf32>
    %6 = arith.addf %5, %4 : vector<8x128xf32>
    %c0_5 = arith.constant 0 : index
    %c0_6 = arith.constant 0 : index
    %7 = vector.load %arg4[%c0_5, %c0_6] : memref<8x128xf32, #tpu.memory_space<vmem>>, vector<8x128xf32>
    tpu.vector_store %arg4[%c0_5, %c0_6], %6 {strides = array<i32>} : memref<8x128xf32, #tpu.memory_space<vmem>>, vector<8x128xf32>,
    return
  }
  func.func @transform_0(%arg0: i32) -> (i32, i32) {
    %c0_i32 = arith.constant 0 : i32
    %c0_i32_0 = arith.constant 0 : i32
    return %arg0, %c0_i32 : i32, i32
  }
  func.func @transform_1(%arg0: i32) -> (i32, i32) {
    %c0_i32 = arith.constant 0 : i32
    %c0_i32_0 = arith.constant 0 : i32
    %c0_i32_1 = arith.constant 0 : i32
    return %c0_i32, %c0_i32_0 : i32, i32
  }
  func.func @transform_2(%arg0: i32) -> (i32, i32) {
    %c0_i32 = arith.constant 0 : i32
    %c0_i32_0 = arith.constant 0 : i32
    %c0_i32_1 = arith.constant 0 : i32
    return %c0_i32, %c0_i32_0 : i32, i32
  }
  func.func @transform_3(%arg0: i32) -> (i32, i32) {
    %c0_i32 = arith.constant 0 : i32
    %c0_i32_0 = arith.constant 0 : i32
    return %arg0, %c0_i32 : i32, i32
  }
}

</mosaic_0001>

<llo_original>
// kernel: tpu_custom_call.1
$region0: #{tpu_custom_call.1}
  #allocation0 [shape = 'u32[]', space=smem, size = 0x4, offset = 0x4, fixed_abs, tag = 'smem constant byte address 0x4 - core index']
  #allocation1 [shape = 'u32[144,128]{1,0:T(1,128)}', space=vmem, size = 0x12000, scoped, tag = 'internal scratch']
  %s0 = inlined_call_operand.hbm [shape: f32[8,128], index: 0, kind: input, shape index: {}]
  %s1 = inlined_call_operand.vmem [shape: f32[1,128], index: 1, kind: input, shape index: {}]
  %s2 = inlined_call_operand.vmem [shape: f32[1,128], index: 2, kind: input, shape index: {}]
  %s3 = inlined_call_operand.hbm [shape: f32[8,128], index: 3, kind: output, shape index: {}]
  %s4 = sld [smem:[#allocation0]]
  $region26: #{tpu_custom_call.1} parent=0
    _
  %s6 = ssub.s32 1, %s4
  %s7 = scalar_select 0, %s6, %s4
  $region1: #{tpu_custom_call.1} parent=0
    #allocation2 [shape = 'u8[4096]{0}', space=vmem, size = 0x1000, scoped, tag = 'input window, operand 0, single buffered']
    #allocation3 [shape = 's32[1]{0}', space=sflag, size = 0x4, scoped, tag = 'scoped memory for tpu_custom_call.1']
    #allocation4 [shape = 's32[1]{0}', space=sflag, size = 0x4, scoped, tag = 'scoped memory for tpu_custom_call.1']
    #allocation5 [shape = 'u8[4096]{0}', space=vmem, size = 0x1000, scoped, tag = 'output window, operand 0, single buffered']
    %8 = vsyncpa [#allocation3], 0
    %9 = vsyncpa [#allocation4], 0
    // Predicated region
    $region2: #{tpu_custom_call.1} parent=1 // pred_check
      _
    $region3: #{tpu_custom_call.1} parent=1 // pred_check_branch
      %11 = sbr.rel (0) target = $region5
    $region4: #{tpu_custom_call.1} parent=1 // pred_region
      %s13 = ssub.s32 128, 128
      %14 = vsyncadd [#allocation3], %s13
      %s16 = sshll.u32 [#allocation2], 4
      %s17 = int_to_ptr.vmem [resolvable:$true] %s16
      %19 = dma.hbm_to_vmem [thread:$0]  %s0, 128, %s17, [#allocation3]
    $region5: #{tpu_custom_call.1} parent=1 // pred_fallthru
      _
    // Predicated region
    $region6: #{tpu_custom_call.1} parent=1 // pred_check
      _
    $region7: #{tpu_custom_call.1} parent=1 // pred_check_branch
      %21 = sbr.rel (0) target = $region9
    $region8: #{tpu_custom_call.1} parent=1 // pred_region
      _
    $region9: #{tpu_custom_call.1} parent=1 // pred_fallthru
      _
    // Predicated region
    $region10: #{tpu_custom_call.1} parent=1 // pred_check
      _
    $region11: #{tpu_custom_call.1} parent=1 // pred_check_branch
      %23 = sbr.rel (0) target = $region13
    $region12: #{tpu_custom_call.1} parent=1 // pred_region
      _
    $region13: #{tpu_custom_call.1} parent=1 // pred_fallthru
      _
    // Predicated region
    $region14: #{tpu_custom_call.1} parent=1 // pred_check
      _
    $region15: #{tpu_custom_call.1} parent=1 // pred_check_branch
      %25 = sbr.rel (0) target = $region17
    $region16: #{tpu_custom_call.1} parent=1 // pred_region
      %26 = dma.done [#allocation3], 128
    $region17: #{tpu_custom_call.1} parent=1 // pred_fallthru
      _
    %v27 = vld [vmem:[%s1] sm:$0x1]
    %v28 = vld [vmem:[#allocation2] sm:$0xff]
    %v29 = vld [vmem:[%s2] sm:$0x1]
    %v31 = vlaneseq
    %v32 = vshrl.u32 %v31, 7
    %v33 = vsub.s32 0, %v32
    %v34 = vrot.slane %v29, %v33
    %v36 = vmul.f32 %v28, %v34
    %v38 = vlaneseq
    %v39 = vshrl.u32 %v38, 7
    %v40 = vsub.s32 0, %v39
    %v41 = vrot.slane %v27, %v40
    %v43 = vadd.f32 %v41, %v36
    %44 = vst [vmem:[#allocation5] sm:$0xff] %v43
    // Predicated region
    $region18: #{tpu_custom_call.1} parent=1 // pred_check
      _
    $region19: #{tpu_custom_call.1} parent=1 // pred_check_branch
      %46 = sbr.rel (0) target = $region21
    $region20: #{tpu_custom_call.1} parent=1 // pred_region
      %s48 = ssub.s32 128, 128
      %49 = vsyncadd [#allocation4], %s48
      %s51 = sshll.u32 [#allocation5], 4
      %s52 = int_to_ptr.vmem [resolvable:$true] %s51
      %54 = dma.vmem_to_hbm [thread:$0]  %s52, 128, %s3, [#allocation4]
    $region21: #{tpu_custom_call.1} parent=1 // pred_fallthru
      _
    // Predicated region
    $region22: #{tpu_custom_call.1} parent=1 // pred_check
      _
    $region23: #{tpu_custom_call.1} parent=1 // pred_check_branch
      %56 = sbr.rel (0) target = $region25
    $region24: #{tpu_custom_call.1} parent=1 // pred_region
      %57 = dma.done [#allocation4], 128
    $region25: #{tpu_custom_call.1} parent=1 // pred_fallthru
      _
    %58 = vsyncpa [#allocation3], 1
    %59 = vsyncpa [#allocation4], 1

</llo_original>
